<compile_context>
chip_gen: v6e
topology: v6e:2x2x1
jax: 0.10.0
libtpu: 0.0.40
codegen_flags: <defaults>
</compile_context>

<pallas_src>
import math

import jax
import jax.numpy as jnp
from jax import lax
from jax.experimental import pallas as pl
from jax.experimental.pallas import tpu as pltpu

EPS = 1e-16
_INV_SQRT2 = 1.0 / math.sqrt(2.0)
_INV_SQRT2PI = 1.0 / math.sqrt(2.0 * math.pi)


# ----------------------------- kernel bodies ------------------------------- #

def _relu_moments(mu_f, var_f):
    """Gaussian ReLU moments (elementwise epilogue, VPU + EUP)."""
    zeros = var_f == 0.0
    var_c = jnp.maximum(var_f, EPS)
    inv_sig = lax.rsqrt(var_c)            # one EUP op instead of sqrt + divide
    sig = var_c * inv_sig                  # == sqrt(var_c)
    alpha = mu_f * inv_sig                 # sig >= 1e-8 > EPS, no extra clamp needed
    cdf = 0.5 * (1.0 + lax.erf(alpha * _INV_SQRT2))
    pdf = _INV_SQRT2PI * jnp.exp(-0.5 * (alpha * alpha))
    mu2 = mu_f * mu_f
    relu_mean = mu_f * cdf + sig * pdf
    relu_var = (var_c + mu2) * cdf + mu_f * sig * pdf - relu_mean * relu_mean
    relu_mean = jnp.where(zeros, jnp.maximum(mu_f, 0.0), relu_mean)
    relu_var = jnp.where(zeros, 0.0, jnp.maximum(relu_var, EPS))
    return relu_mean, relu_var


def _make_kernel(isoutput: bool, has_var: bool):
    if has_var:
        def kernel(mu_ref, var_ref, wt_ref, w2_ref, b_ref, mu_o_ref, var_o_ref):
            mu_f = jnp.dot(mu_ref[...], wt_ref[...],
                           preferred_element_type=jnp.float32) + b_ref[...]
            var_f = jnp.dot(var_ref[...], w2_ref[...],
                            preferred_element_type=jnp.float32)
            if isoutput:
                mu_o_ref[...] = mu_f
                var_o_ref[...] = var_f
            else:
                m, v = _relu_moments(mu_f, var_f)
                mu_o_ref[...] = m
                var_o_ref[...] = v
    else:
        # var_h is None -> var_f == 0 everywhere: skip the variance matmul/DMA.
        def kernel(mu_ref, wt_ref, b_ref, mu_o_ref, var_o_ref):
            mu_f = jnp.dot(mu_ref[...], wt_ref[...],
                           preferred_element_type=jnp.float32) + b_ref[...]
            if isoutput:
                mu_o_ref[...] = mu_f
            else:
                # relu_moments with var == 0 reduces to relu(mu_f), var 0.
                mu_o_ref[...] = jnp.maximum(mu_f, 0.0)
            var_o_ref[...] = jnp.zeros_like(var_o_ref)
    return kernel


# ------------------------------ tile sizing -------------------------------- #

def _pick_tb(B, F_in, F_out, has_var, budget_bytes=28 << 20, tb_cap=1024):
    """Largest multiple-of-8 batch tile that keeps VMEM within budget.

    Budget is conservative enough for v7x's 64 MiB physical / 32 MiB scoped VMEM;
    v5e/v6e have more headroom.
    """
    n_w = 2 if has_var else 1
    resident = (n_w * F_in * F_out + F_out) * 4           # W^T (+ W^2) + bias, f32
    per_row = (n_w * F_in + 2 * F_out) * 4 * 2            # double-buffered ins + outs
    avail = budget_bytes - 2 * resident                   # worst case: resident 2x-buffered
    tb = avail // per_row if avail > per_row * 8 else 8
    tb = max(8, min(tb_cap, (tb // 8) * 8))
    b_pad8 = ((B + 7) // 8) * 8
    return int(min(tb, b_pad8)), int(resident), int(per_row)


# ------------------------------ pallas_call -------------------------------- #

def _build_call(isoutput, has_var, B_pad, F_in, F_out, tb,
                single_buffer_resident, vmem_limit_bytes):
    kernel = _make_kernel(isoutput, has_var)
    res_kw = {"pipeline_mode": pl.Buffered(1)} if single_buffer_resident else {}

    tile_in = pl.BlockSpec((tb, F_in), lambda i: (i, 0))
    w_spec = pl.BlockSpec((F_in, F_out), lambda i: (0, 0), **res_kw)
    b_spec = pl.BlockSpec((1, F_out), lambda i: (0, 0), **res_kw)
    out_spec = pl.BlockSpec((tb, F_out), lambda i: (i, 0))

    if has_var:
        in_specs = [tile_in, tile_in, w_spec, w_spec, b_spec]
    else:
        in_specs = [tile_in, w_spec, b_spec]

    return pl.pallas_call(
        kernel,
        out_shape=(
            jax.ShapeDtypeStruct((B_pad, F_out), jnp.float32),
            jax.ShapeDtypeStruct((B_pad, F_out), jnp.float32),
        ),
        grid_spec=pltpu.PrefetchScalarGridSpec(
            num_scalar_prefetch=0,
            grid=(B_pad // tb,),
            in_specs=in_specs,
            out_specs=[out_spec, out_spec],
        ),
        compiler_params=pltpu.CompilerParams(
            dimension_semantics=("parallel",),
            vmem_limit_bytes=vmem_limit_bytes,
        ),
    )


def mmdet_layer_forward(mu_h, var_h, weight, bias, *, isoutput=False):
    """Pallas implementation of MMDetLayer.forward.

    mu_h  : (B, F_in) float32
    var_h : (B, F_in) float32 or None (treated as exact zeros)
    weight: (F_out, F_in) float32  (PyTorch Linear convention)
    bias  : (F_out,) float32
    returns (mu_out, var_out), each (B, F_out) float32
    """
    mu_h = jnp.asarray(mu_h, jnp.float32)
    has_var = var_h is not None
    B, F_in = mu_h.shape
    F_out = weight.shape[0]

    wt = jnp.asarray(weight, jnp.float32).T                 # (F_in, F_out)
    b2 = jnp.asarray(bias, jnp.float32).reshape(1, F_out)

    tb, resident, per_row = _pick_tb(B, F_in, F_out, has_var)
    B_pad = pl.cdiv(B, tb) * tb
    pad_cfg = ((0, B_pad - B), (0, 0))

    mu_p = jnp.pad(mu_h, pad_cfg) if B_pad != B else mu_h
    args = [mu_p]
    if has_var:
        var_p = jnp.asarray(var_h, jnp.float32)
        if B_pad != B:
            var_p = jnp.pad(var_p, pad_cfg)
        w2 = wt * wt                      # hoisted out of the kernel body (once)
        args += [var_p, wt, w2, b2]
    else:
        args += [wt, b2]

    need = 2 * resident + per_row * tb
    vmem_limit = int(min(48 << 20, max(8 << 20, 2 * need)))

    def run(single_buffer):
        call = _build_call(isoutput, has_var, B_pad, F_in, F_out, tb,
                           single_buffer, vmem_limit)
        return call(*args)

    try:
        mu_o, var_o = run(True)
    except Exception:
        # Fallback if this jax version rejects pl.Buffered(1) on resident inputs.
        mu_o, var_o = run(False)

    if B_pad != B:
        mu_o = mu_o[:B]
        var_o = var_o[:B]
    return mu_o, var_o


# ------------------------------ reference ---------------------------------- #

def _reference(mu_h, var_h, weight, bias, isoutput=False):
    """Pure-JAX reference mirroring the PyTorch module."""
    mu_f = mu_h @ weight.T + bias
    var_f = var_h @ (weight ** 2).T
    if isoutput:
        return mu_f, var_f
    zeros = (var_f == 0.0)
    sig = jnp.sqrt(jnp.maximum(var_f, EPS))
    alpha = mu_f / jnp.maximum(sig, EPS)
    cdf = 0.5 * (1.0 + lax.erf(alpha / math.sqrt(2.0)))
    pdf = 1.0 / math.sqrt(2.0 * math.pi) * jnp.exp(-0.5 * alpha ** 2)
    relu_mean = mu_f * cdf + sig * pdf
    relu_var = (sig ** 2 + mu_f ** 2) * cdf + mu_f * sig * pdf - relu_mean ** 2
    relu_mean = mu_f * (mu_f > 0) * zeros + relu_mean * (~zeros)
    relu_var = jnp.maximum(relu_var, EPS)
    relu_var = relu_var * (~zeros)
    return relu_mean, relu_var


if __name__ == "__main__":
    B, F_IN, F_OUT = 8, 32, 128

    key = jax.random.PRNGKey(0)
    k_mu, k_var, k_w, k_b = jax.random.split(key, 4)

    mu_h = jax.random.normal(k_mu, (B, F_IN), dtype=jnp.float32)
    var_h = jax.random.uniform(k_var, (B, F_IN), dtype=jnp.float32)  # >= 0

    # Deterministic init mimicking nn.Linear.reset_parameters (uniform +-1/sqrt(F_in)).
    bound = 1.0 / math.sqrt(F_IN)
    weight = jax.random.uniform(k_w, (F_OUT, F_IN), jnp.float32, -bound, bound)
    bias = jax.random.uniform(k_b, (F_OUT,), jnp.float32, -bound, bound)

    # Hidden layer path (relu_moments).
    mu_o, var_o = mmdet_layer_forward(mu_h, var_h, weight, bias, isoutput=False)
    jax.block_until_ready((mu_o, var_o))

    # Output layer path with var_h=None (variance matmul short-circuited).
    mu_o2, var_o2 = mmdet_layer_forward(mu_h, None, weight, bias, isoutput=True)
    jax.block_until_ready((mu_o2, var_o2))

    # Hidden layer path with var_h=None (relu on mean, zero variance).
    mu_o3, var_o3 = mmdet_layer_forward(mu_h, None, weight, bias, isoutput=False)
    jax.block_until_ready((mu_o3, var_o3))

    # Sanity checks vs pure-JAX reference.
    ref_mu, ref_var = _reference(mu_h, var_h, weight, bias, isoutput=False)
    assert jnp.allclose(mu_o, ref_mu, atol=1e-5, rtol=1e-5)
    assert jnp.allclose(var_o, ref_var, atol=1e-5, rtol=1e-5)

    zeros_var = jnp.zeros_like(mu_h)
    ref_mu2, ref_var2 = _reference(mu_h, zeros_var, weight, bias, isoutput=True)
    assert jnp.allclose(mu_o2, ref_mu2, atol=1e-5, rtol=1e-5)
    assert jnp.allclose(var_o2, ref_var2, atol=1e-5, rtol=1e-5)

    ref_mu3, ref_var3 = _reference(mu_h, zeros_var, weight, bias, isoutput=False)
    assert jnp.allclose(mu_o3, ref_mu3, atol=1e-5, rtol=1e-5)
    assert jnp.allclose(var_o3, ref_var3, atol=1e-5, rtol=1e-5)

    print("KERNEL_OK")
</pallas_src>

<mosaic_0001>
module attributes {stable_mosaic.version = 11 : i64} {
  func.func @kernel(%arg0: i32, %arg1: memref<8x32xf32, #tpu.memory_space<vmem>>, %arg2: memref<8x32xf32, #tpu.memory_space<vmem>>, %arg3: memref<32x128xf32, #tpu.memory_space<vmem>>, %arg4: memref<32x128xf32, #tpu.memory_space<vmem>>, %arg5: memref<1x128xf32, #tpu.memory_space<vmem>>, %arg6: memref<8x128xf32, #tpu.memory_space<vmem>>, %arg7: memref<8x128xf32, #tpu.memory_space<vmem>>) attributes {dimension_semantics = [#tpu.dimension_semantics<parallel>], iteration_bounds = array<i64: 1>, scalar_prefetch = 0 : i64, scratch_operands = 0 : i64, tpu.core_type = #tpu.core_type<tc>, window_params = [{transform_indices = @transform_0, window_bounds = array<i64: 8, 32>}, {transform_indices = @transform_1, window_bounds = array<i64: 8, 32>}, {pipeline_mode = #tpu.pipeline_mode<synchronous>, transform_indices = @transform_2, window_bounds = array<i64: 32, 128>}, {pipeline_mode = #tpu.pipeline_mode<synchronous>, transform_indices = @transform_3, window_bounds = array<i64: 32, 128>}, {pipeline_mode = #tpu.pipeline_mode<synchronous>, transform_indices = @transform_4, window_bounds = array<i64: 1, 128>}, {transform_indices = @transform_5, window_bounds = array<i64: 8, 128>}, {transform_indices = @transform_6, window_bounds = array<i64: 8, 128>}]} {
    %c0 = arith.constant 0 : index
    %c0_0 = arith.constant 0 : index
    %0 = vector.load %arg1[%c0, %c0_0] : memref<8x32xf32, #tpu.memory_space<vmem>>, vector<8x32xf32>
    %c0_1 = arith.constant 0 : index
    %c0_2 = arith.constant 0 : index
    %1 = vector.load %arg3[%c0_1, %c0_2] : memref<32x128xf32, #tpu.memory_space<vmem>>, vector<32x128xf32>
    %cst = arith.constant dense<0.000000e+00> : vector<8x128xf32>
    %2 = tpu.matmul %0, %1, %cst {dimension_numbers = #tpu.dot_dimension_numbers<[1], [0], [0], [1], [0, 0, 1, 1], [], []>} : vector<8x32xf32>, vector<32x128xf32>, vector<8x128xf32> -> vector<8x128xf32>
    %c0_3 = arith.constant 0 : index
    %c0_4 = arith.constant 0 : index
    %3 = vector.load %arg5[%c0_3, %c0_4] : memref<1x128xf32, #tpu.memory_space<vmem>>, vector<1x128xf32>
    %4 = vector.broadcast %3 : vector<1x128xf32> to vector<8x128xf32>
    %5 = arith.addf %2, %4 : vector<8x128xf32>
    %c0_5 = arith.constant 0 : index
    %c0_6 = arith.constant 0 : index
    %6 = vector.load %arg2[%c0_5, %c0_6] : memref<8x32xf32, #tpu.memory_space<vmem>>, vector<8x32xf32>
    %c0_7 = arith.constant 0 : index
    %c0_8 = arith.constant 0 : index
    %7 = vector.load %arg4[%c0_7, %c0_8] : memref<32x128xf32, #tpu.memory_space<vmem>>, vector<32x128xf32>
    %cst_9 = arith.constant dense<0.000000e+00> : vector<8x128xf32>
    %8 = tpu.matmul %6, %7, %cst_9 {dimension_numbers = #tpu.dot_dimension_numbers<[1], [0], [0], [1], [0, 0, 1, 1], [], []>} : vector<8x32xf32>, vector<32x128xf32>, vector<8x128xf32> -> vector<8x128xf32>
    %cst_10 = arith.constant 0.000000e+00 : f32
    %9 = vector.broadcast %cst_10 : f32 to vector<8x128xf32>
    %10 = arith.cmpf oeq, %8, %9 : vector<8x128xf32>
    %cst_11 = arith.constant 1.000000e-16 : f32
    %11 = vector.broadcast %cst_11 : f32 to vector<8x128xf32>
    %12 = arith.maximumf %8, %11 : vector<8x128xf32>
    %13 = math.rsqrt %12 : vector<8x128xf32>
    %14 = arith.mulf %12, %13 : vector<8x128xf32>
    %15 = arith.mulf %5, %13 : vector<8x128xf32>
    %cst_12 = arith.constant 0.707106769 : f32
    %16 = vector.broadcast %cst_12 : f32 to vector<8x128xf32>
    %17 = arith.mulf %15, %16 : vector<8x128xf32>
    %18 = math.erf %17 : vector<8x128xf32>
    %cst_13 = arith.constant 1.000000e+00 : f32
    %19 = vector.broadcast %cst_13 : f32 to vector<8x128xf32>
    %20 = arith.addf %19, %18 : vector<8x128xf32>
    %cst_14 = arith.constant 5.000000e-01 : f32
    %21 = vector.broadcast %cst_14 : f32 to vector<8x128xf32>
    %22 = arith.mulf %21, %20 : vector<8x128xf32>
    %23 = arith.mulf %15, %15 : vector<8x128xf32>
    %cst_15 = arith.constant -5.000000e-01 : f32
    %24 = vector.broadcast %cst_15 : f32 to vector<8x128xf32>
    %25 = arith.mulf %24, %23 : vector<8x128xf32>
    %26 = math.exp %25 : vector<8x128xf32>
    %cst_16 = arith.constant 0.398942292 : f32
    %27 = vector.broadcast %cst_16 : f32 to vector<8x128xf32>
    %28 = arith.mulf %27, %26 : vector<8x128xf32>
    %29 = arith.mulf %5, %5 : vector<8x128xf32>
    %30 = arith.mulf %5, %22 : vector<8x128xf32>
    %31 = arith.mulf %14, %28 : vector<8x128xf32>
    %32 = arith.addf %30, %31 : vector<8x128xf32>
    %33 = arith.addf %12, %29 : vector<8x128xf32>
    %34 = arith.mulf %33, %22 : vector<8x128xf32>
    %35 = arith.mulf %5, %14 : vector<8x128xf32>
    %36 = arith.mulf %35, %28 : vector<8x128xf32>
    %37 = arith.addf %34, %36 : vector<8x128xf32>
    %38 = arith.mulf %32, %32 : vector<8x128xf32>
    %39 = arith.subf %37, %38 : vector<8x128xf32>
    %cst_17 = arith.constant 0.000000e+00 : f32
    %40 = vector.broadcast %cst_17 : f32 to vector<8x128xf32>
    %41 = arith.maximumf %5, %40 : vector<8x128xf32>
    %42 = arith.select %10, %41, %32 : vector<8x128xi1>, vector<8x128xf32>
    %cst_18 = arith.constant 1.000000e-16 : f32
    %43 = vector.broadcast %cst_18 : f32 to vector<8x128xf32>
    %44 = arith.maximumf %39, %43 : vector<8x128xf32>
    %cst_19 = arith.constant 0.000000e+00 : f32
    %45 = vector.broadcast %cst_19 : f32 to vector<8x128xf32>
    %46 = arith.select %10, %45, %44 : vector<8x128xi1>, vector<8x128xf32>
    %c0_20 = arith.constant 0 : index
    %c0_21 = arith.constant 0 : index
    %47 = vector.load %arg6[%c0_20, %c0_21] : memref<8x128xf32, #tpu.memory_space<vmem>>, vector<8x128xf32>
    tpu.vector_store %arg6[%c0_20, %c0_21], %42 {strides = array<i32>} : memref<8x128xf32, #tpu.memory_space<vmem>>, vector<8x128xf32>,
    %c0_22 = arith.constant 0 : index
    %c0_23 = arith.constant 0 : index
    %48 = vector.load %arg7[%c0_22, %c0_23] : memref<8x128xf32, #tpu.memory_space<vmem>>, vector<8x128xf32>
    tpu.vector_store %arg7[%c0_22, %c0_23], %46 {strides = array<i32>} : memref<8x128xf32, #tpu.memory_space<vmem>>, vector<8x128xf32>,
    return
  }
  func.func @transform_0(%arg0: i32) -> (i32, i32) {
    %c0_i32 = arith.constant 0 : i32
    %c0_i32_0 = arith.constant 0 : i32
    return %arg0, %c0_i32 : i32, i32
  }
  func.func @transform_1(%arg0: i32) -> (i32, i32) {
    %c0_i32 = arith.constant 0 : i32
    %c0_i32_0 = arith.constant 0 : i32
    return %arg0, %c0_i32 : i32, i32
  }
  func.func @transform_2(%arg0: i32) -> (i32, i32) {
    %c0_i32 = arith.constant 0 : i32
    %c0_i32_0 = arith.constant 0 : i32
    %c0_i32_1 = arith.constant 0 : i32
    return %c0_i32, %c0_i32_0 : i32, i32
  }
  func.func @transform_3(%arg0: i32) -> (i32, i32) {
    %c0_i32 = arith.constant 0 : i32
    %c0_i32_0 = arith.constant 0 : i32
    %c0_i32_1 = arith.constant 0 : i32
    return %c0_i32, %c0_i32_0 : i32, i32
  }
  func.func @transform_4(%arg0: i32) -> (i32, i32) {
    %c0_i32 = arith.constant 0 : i32
    %c0_i32_0 = arith.constant 0 : i32
    %c0_i32_1 = arith.constant 0 : i32
    return %c0_i32, %c0_i32_0 : i32, i32
  }
  func.func @transform_5(%arg0: i32) -> (i32, i32) {
    %c0_i32 = arith.constant 0 : i32
    %c0_i32_0 = arith.constant 0 : i32
    return %arg0, %c0_i32 : i32, i32
  }
  func.func @transform_6(%arg0: i32) -> (i32, i32) {
    %c0_i32 = arith.constant 0 : i32
    %c0_i32_0 = arith.constant 0 : i32
    return %arg0, %c0_i32 : i32, i32
  }
}

module attributes {stable_mosaic.version = 11 : i64} {
  func.func @kernel(%arg0: i32, %arg1: memref<8x32xf32, #tpu.memory_space<vmem>>, %arg2: memref<8x32xf32, #tpu.memory_space<vmem>>, %arg3: memref<32x128xf32, #tpu.memory_space<vmem>>, %arg4: memref<32x128xf32, #tpu.memory_space<vmem>>, %arg5: memref<1x128xf32, #tpu.memory_space<vmem>>, %arg6: memref<8x128xf32, #tpu.memory_space<vmem>>, %arg7: memref<8x128xf32, #tpu.memory_space<vmem>>) attributes {dimension_semantics = [#tpu.dimension_semantics<parallel>], iteration_bounds = array<i64: 1>, scalar_prefetch = 0 : i64, scratch_operands = 0 : i64, tpu.core_type = #tpu.core_type<tc>, window_params = [{transform_indices = @transform_0, window_bounds = array<i64: 8, 32>}, {transform_indices = @transform_1, window_bounds = array<i64: 8, 32>}, {pipeline_mode = #tpu.pipeline_mode<synchronous>, transform_indices = @transform_2, window_bounds = array<i64: 32, 128>}, {pipeline_mode = #tpu.pipeline_mode<synchronous>, transform_indices = @transform_3, window_bounds = array<i64: 32, 128>}, {pipeline_mode = #tpu.pipeline_mode<synchronous>, transform_indices = @transform_4, window_bounds = array<i64: 1, 128>}, {transform_indices = @transform_5, window_bounds = array<i64: 8, 128>}, {transform_indices = @transform_6, window_bounds = array<i64: 8, 128>}]} {
    %c0 = arith.constant 0 : index
    %c0_0 = arith.constant 0 : index
    %0 = vector.load %arg1[%c0, %c0_0] : memref<8x32xf32, #tpu.memory_space<vmem>>, vector<8x32xf32>
    %c0_1 = arith.constant 0 : index
    %c0_2 = arith.constant 0 : index
    %1 = vector.load %arg3[%c0_1, %c0_2] : memref<32x128xf32, #tpu.memory_space<vmem>>, vector<32x128xf32>
    %cst = arith.constant dense<0.000000e+00> : vector<8x128xf32>
    %2 = tpu.matmul %0, %1, %cst {dimension_numbers = #tpu.dot_dimension_numbers<[1], [0], [0], [1], [0, 0, 1, 1], [], []>} : vector<8x32xf32>, vector<32x128xf32>, vector<8x128xf32> -> vector<8x128xf32>
    %c0_3 = arith.constant 0 : index
    %c0_4 = arith.constant 0 : index
    %3 = vector.load %arg5[%c0_3, %c0_4] : memref<1x128xf32, #tpu.memory_space<vmem>>, vector<1x128xf32>
    %4 = vector.broadcast %3 : vector<1x128xf32> to vector<8x128xf32>
    %5 = arith.addf %2, %4 : vector<8x128xf32>
    %c0_5 = arith.constant 0 : index
    %c0_6 = arith.constant 0 : index
    %6 = vector.load %arg2[%c0_5, %c0_6] : memref<8x32xf32, #tpu.memory_space<vmem>>, vector<8x32xf32>
    %c0_7 = arith.constant 0 : index
    %c0_8 = arith.constant 0 : index
    %7 = vector.load %arg4[%c0_7, %c0_8] : memref<32x128xf32, #tpu.memory_space<vmem>>, vector<32x128xf32>
    %cst_9 = arith.constant dense<0.000000e+00> : vector<8x128xf32>
    %8 = tpu.matmul %6, %7, %cst_9 {dimension_numbers = #tpu.dot_dimension_numbers<[1], [0], [0], [1], [0, 0, 1, 1], [], []>} : vector<8x32xf32>, vector<32x128xf32>, vector<8x128xf32> -> vector<8x128xf32>
    %cst_10 = arith.constant 0.000000e+00 : f32
    %9 = vector.broadcast %cst_10 : f32 to vector<8x128xf32>
    %10 = arith.cmpf oeq, %8, %9 : vector<8x128xf32>
    %cst_11 = arith.constant 1.000000e-16 : f32
    %11 = vector.broadcast %cst_11 : f32 to vector<8x128xf32>
    %12 = arith.maximumf %8, %11 : vector<8x128xf32>
    %13 = math.rsqrt %12 : vector<8x128xf32>
    %14 = arith.mulf %12, %13 : vector<8x128xf32>
    %15 = arith.mulf %5, %13 : vector<8x128xf32>
    %cst_12 = arith.constant 0.707106769 : f32
    %16 = vector.broadcast %cst_12 : f32 to vector<8x128xf32>
    %17 = arith.mulf %15, %16 : vector<8x128xf32>
    %18 = math.erf %17 : vector<8x128xf32>
    %cst_13 = arith.constant 1.000000e+00 : f32
    %19 = vector.broadcast %cst_13 : f32 to vector<8x128xf32>
    %20 = arith.addf %19, %18 : vector<8x128xf32>
    %cst_14 = arith.constant 5.000000e-01 : f32
    %21 = vector.broadcast %cst_14 : f32 to vector<8x128xf32>
    %22 = arith.mulf %21, %20 : vector<8x128xf32>
    %23 = arith.mulf %15, %15 : vector<8x128xf32>
    %cst_15 = arith.constant -5.000000e-01 : f32
    %24 = vector.broadcast %cst_15 : f32 to vector<8x128xf32>
    %25 = arith.mulf %24, %23 : vector<8x128xf32>
    %26 = math.exp %25 : vector<8x128xf32>
    %cst_16 = arith.constant 0.398942292 : f32
    %27 = vector.broadcast %cst_16 : f32 to vector<8x128xf32>
    %28 = arith.mulf %27, %26 : vector<8x128xf32>
    %29 = arith.mulf %5, %5 : vector<8x128xf32>
    %30 = arith.mulf %5, %22 : vector<8x128xf32>
    %31 = arith.mulf %14, %28 : vector<8x128xf32>
    %32 = arith.addf %30, %31 : vector<8x128xf32>
    %33 = arith.addf %12, %29 : vector<8x128xf32>
    %34 = arith.mulf %33, %22 : vector<8x128xf32>
    %35 = arith.mulf %5, %14 : vector<8x128xf32>
    %36 = arith.mulf %35, %28 : vector<8x128xf32>
    %37 = arith.addf %34, %36 : vector<8x128xf32>
    %38 = arith.mulf %32, %32 : vector<8x128xf32>
    %39 = arith.subf %37, %38 : vector<8x128xf32>
    %cst_17 = arith.constant 0.000000e+00 : f32
    %40 = vector.broadcast %cst_17 : f32 to vector<8x128xf32>
    %41 = arith.maximumf %5, %40 : vector<8x128xf32>
    %42 = arith.select %10, %41, %32 : vector<8x128xi1>, vector<8x128xf32>
    %cst_18 = arith.constant 1.000000e-16 : f32
    %43 = vector.broadcast %cst_18 : f32 to vector<8x128xf32>
    %44 = arith.maximumf %39, %43 : vector<8x128xf32>
    %cst_19 = arith.constant 0.000000e+00 : f32
    %45 = vector.broadcast %cst_19 : f32 to vector<8x128xf32>
    %46 = arith.select %10, %45, %44 : vector<8x128xi1>, vector<8x128xf32>
    %c0_20 = arith.constant 0 : index
    %c0_21 = arith.constant 0 : index
    %47 = vector.load %arg6[%c0_20, %c0_21] : memref<8x128xf32, #tpu.memory_space<vmem>>, vector<8x128xf32>
    tpu.vector_store %arg6[%c0_20, %c0_21], %42 {strides = array<i32>} : memref<8x128xf32, #tpu.memory_space<vmem>>, vector<8x128xf32>,
    %c0_22 = arith.constant 0 : index
    %c0_23 = arith.constant 0 : index
    %48 = vector.load %arg7[%c0_22, %c0_23] : memref<8x128xf32, #tpu.memory_space<vmem>>, vector<8x128xf32>
    tpu.vector_store %arg7[%c0_22, %c0_23], %46 {strides = array<i32>} : memref<8x128xf32, #tpu.memory_space<vmem>>, vector<8x128xf32>,
    return
  }
  func.func @transform_0(%arg0: i32) -> (i32, i32) {
    %c0_i32 = arith.constant 0 : i32
    %c0_i32_0 = arith.constant 0 : i32
    return %arg0, %c0_i32 : i32, i32
  }
  func.func @transform_1(%arg0: i32) -> (i32, i32) {
    %c0_i32 = arith.constant 0 : i32
    %c0_i32_0 = arith.constant 0 : i32
    return %arg0, %c0_i32 : i32, i32
  }
  func.func @transform_2(%arg0: i32) -> (i32, i32) {
    %c0_i32 = arith.constant 0 : i32
    %c0_i32_0 = arith.constant 0 : i32
    %c0_i32_1 = arith.constant 0 : i32
    return %c0_i32, %c0_i32_0 : i32, i32
  }
  func.func @transform_3(%arg0: i32) -> (i32, i32) {
    %c0_i32 = arith.constant 0 : i32
    %c0_i32_0 = arith.constant 0 : i32
    %c0_i32_1 = arith.constant 0 : i32
    return %c0_i32, %c0_i32_0 : i32, i32
  }
  func.func @transform_4(%arg0: i32) -> (i32, i32) {
    %c0_i32 = arith.constant 0 : i32
    %c0_i32_0 = arith.constant 0 : i32
    %c0_i32_1 = arith.constant 0 : i32
    return %c0_i32, %c0_i32_0 : i32, i32
  }
  func.func @transform_5(%arg0: i32) -> (i32, i32) {
    %c0_i32 = arith.constant 0 : i32
    %c0_i32_0 = arith.constant 0 : i32
    return %arg0, %c0_i32 : i32, i32
  }
  func.func @transform_6(%arg0: i32) -> (i32, i32) {
    %c0_i32 = arith.constant 0 : i32
    %c0_i32_0 = arith.constant 0 : i32
    return %arg0, %c0_i32 : i32, i32
  }
}

</mosaic_0001>

<llo_original>
// kernel: tpu_custom_call.1
$region0: #{tpu_custom_call.1}
  #allocation0 [shape = 'u32[]', space=smem, size = 0x4, offset = 0x4, fixed_abs, tag = 'smem constant byte address 0x4 - core index']
  #allocation1 [shape = 'u32[144,128]{1,0:T(1,128)}', space=vmem, size = 0x12000, scoped, tag = 'internal scratch']
  %s0 = inlined_call_operand.hbm [shape: f32[8,32], index: 0, kind: input, shape index: {}]
  %s1 = inlined_call_operand.hbm [shape: f32[8,32], index: 1, kind: input, shape index: {}]
  %s2 = inlined_call_operand.hbm [shape: f32[32,128], index: 2, kind: input, shape index: {}]
  %s3 = inlined_call_operand.hbm [shape: f32[32,128], index: 3, kind: input, shape index: {}]
  %s4 = inlined_call_operand.vmem [shape: f32[1,128], index: 4, kind: input, shape index: {}]
  %s5 = inlined_call_operand.hbm [shape: f32[8,128], index: 5, kind: output, shape index: {0}]
  %s6 = inlined_call_operand.hbm [shape: f32[8,128], index: 6, kind: output, shape index: {1}]
  %7 = xla_tuple %s5, %s6
  %s8 = sld [smem:[#allocation0]]
  $region54: #{tpu_custom_call.1} parent=0
    _
  %s10 = ssub.s32 1, %s8
  %s11 = scalar_select 0, %s10, %s8
  $region1: #{tpu_custom_call.1} parent=0
    #allocation2 [shape = 'u8[4096]{0}', space=vmem, size = 0x1000, scoped, tag = 'input window, operand 0, single buffered']
    #allocation3 [shape = 's32[1]{0}', space=sflag, size = 0x4, scoped, tag = 'scoped memory for tpu_custom_call.1']
    #allocation4 [shape = 's32[1]{0}', space=sflag, size = 0x4, scoped, tag = 'scoped memory for tpu_custom_call.1']
    #allocation5 [shape = 'u8[4096]{0}', space=vmem, size = 0x1000, scoped, tag = 'input window, operand 1, single buffered']
    #allocation6 [shape = 's32[1]{0}', space=sflag, size = 0x4, scoped, tag = 'scoped memory for tpu_custom_call.1']
    #allocation7 [shape = 'u8[16384]{0}', space=vmem, size = 0x4000, scoped, tag = 'input window, operand 2, single buffered']
    #allocation8 [shape = 'u8[16384]{0}', space=vmem, size = 0x4000, scoped, tag = 'input window, operand 3, single buffered']
    #allocation9 [shape = 's32[1]{0}', space=sflag, size = 0x4, scoped, tag = 'scoped memory for tpu_custom_call.1']
    #allocation10 [shape = 'u8[4096]{0}', space=vmem, size = 0x1000, scoped, tag = 'output window, operand 0, single buffered']
    #allocation11 [shape = 'u8[4096]{0}', space=vmem, size = 0x1000, scoped, tag = 'output window, operand 1, single buffered']
    #allocation12 [shape = 's32[1]{0}', space=sflag, size = 0x4, scoped, tag = 'scoped memory for tpu_custom_call.1']
    %12 = vsyncpa [#allocation3], 0
    %13 = vsyncpa [#allocation6], 0
    %14 = vsyncpa [#allocation9], 0
    %15 = vsyncpa [#allocation4], 0
    %16 = vsyncpa [#allocation12], 0
    // Predicated region
    $region2: #{tpu_custom_call.1} parent=1 // pred_check
      _
    $region3: #{tpu_custom_call.1} parent=1 // pred_check_branch
      %18 = sbr.rel (0) target = $region5
    $region4: #{tpu_custom_call.1} parent=1 // pred_region
      %s20 = ssub.s32 128, 128
      %21 = vsyncadd [#allocation3], %s20
      %s23 = sshll.u32 [#allocation2], 4
      %s24 = int_to_ptr.vmem [resolvable:$true] %s23
      %26 = dma.hbm_to_vmem [thread:$0]  %s0, 128, %s24, [#allocation3]
    $region5: #{tpu_custom_call.1} parent=1 // pred_fallthru
      _
    // Predicated region
    $region6: #{tpu_custom_call.1} parent=1 // pred_check
      _
    $region7: #{tpu_custom_call.1} parent=1 // pred_check_branch
      %28 = sbr.rel (0) target = $region9
    $region8: #{tpu_custom_call.1} parent=1 // pred_region
      %s30 = ssub.s32 128, 128
      %31 = vsyncadd [#allocation6], %s30
      %s33 = sshll.u32 [#allocation5], 4
      %s34 = int_to_ptr.vmem [resolvable:$true] %s33
      %36 = dma.hbm_to_vmem [thread:$0]  %s1, 128, %s34, [#allocation6]
    $region9: #{tpu_custom_call.1} parent=1 // pred_fallthru
      _
    // Predicated region
    $region10: #{tpu_custom_call.1} parent=1 // pred_check
      _
    $region11: #{tpu_custom_call.1} parent=1 // pred_check_branch
      %38 = sbr.rel (0) target = $region13
    $region12: #{tpu_custom_call.1} parent=1 // pred_region
      %s40 = ssub.s32 512, 512
      %41 = vsyncadd [#allocation6], %s40
      %s42 = sshll.u32 [#allocation7], 4
      %s43 = int_to_ptr.vmem [resolvable:$true] %s42
      %48 = dma.hbm_to_vmem [thread:$0]  %s2, 512, %s43, [#allocation6], 128, 128, 8
    $region13: #{tpu_custom_call.1} parent=1 // pred_fallthru
      _
    // Predicated region
    $region14: #{tpu_custom_call.1} parent=1 // pred_check
      _
    $region15: #{tpu_custom_call.1} parent=1 // pred_check_branch
      %50 = sbr.rel (0) target = $region17
    $region16: #{tpu_custom_call.1} parent=1 // pred_region
      %s52 = ssub.s32 512, 512
      %53 = vsyncadd [#allocation9], %s52
      %s54 = sshll.u32 [#allocation8], 4
      %s55 = int_to_ptr.vmem [resolvable:$true] %s54
      %60 = dma.hbm_to_vmem [thread:$0]  %s3, 512, %s55, [#allocation9], 128, 128, 8
    $region17: #{tpu_custom_call.1} parent=1 // pred_fallthru
      _
    // Predicated region
    $region18: #{tpu_custom_call.1} parent=1 // pred_check
      _
    $region19: #{tpu_custom_call.1} parent=1 // pred_check_branch
      %62 = sbr.rel (0) target = $region21
    $region20: #{tpu_custom_call.1} parent=1 // pred_region
      _
    $region21: #{tpu_custom_call.1} parent=1 // pred_fallthru
      _
    // Predicated region
    $region22: #{tpu_custom_call.1} parent=1 // pred_check
      _
    $region23: #{tpu_custom_call.1} parent=1 // pred_check_branch
      %64 = sbr.rel (0) target = $region25
    $region24: #{tpu_custom_call.1} parent=1 // pred_region
      %65 = dma.done [#allocation3], 128
    $region25: #{tpu_custom_call.1} parent=1 // pred_fallthru
      _
    // Predicated region
    $region26: #{tpu_custom_call.1} parent=1 // pred_check
      _
    $region27: #{tpu_custom_call.1} parent=1 // pred_check_branch
      %67 = sbr.rel (0) target = $region29
    $region28: #{tpu_custom_call.1} parent=1 // pred_region
      %68 = dma.done [#allocation6], 128
    $region29: #{tpu_custom_call.1} parent=1 // pred_fallthru
      _
    // Predicated region
    $region30: #{tpu_custom_call.1} parent=1 // pred_check
      _
    $region31: #{tpu_custom_call.1} parent=1 // pred_check_branch
      %70 = sbr.rel (0) target = $region33
    $region32: #{tpu_custom_call.1} parent=1 // pred_region
      %71 = dma.done [#allocation6], 512
    $region33: #{tpu_custom_call.1} parent=1 // pred_fallthru
      _
    // Predicated region
    $region34: #{tpu_custom_call.1} parent=1 // pred_check
      _
    $region35: #{tpu_custom_call.1} parent=1 // pred_check_branch
      %73 = sbr.rel (0) target = $region37
    $region36: #{tpu_custom_call.1} parent=1 // pred_region
      %74 = dma.done [#allocation9], 512
    $region37: #{tpu_custom_call.1} parent=1 // pred_fallthru
      _
    %v75 = vld [vmem:[#allocation2] sm:$0xff]
    %v76 = vld [vmem:[#allocation7] sm:$0xff]
    %v77 = vld [vmem:[#allocation7 + $0x8] sm:$0xff]
    %v78 = vld [vmem:[#allocation7 + $0x10] sm:$0xff]
    %v79 = vld [vmem:[#allocation7 + $0x18] sm:$0xff]
    %v80 = vld [vmem:[%s4] sm:$0x1]
    %v82 = vlaneseq
    %v83 = vshrl.u32 %v82, 7
    %v84 = vsub.s32 0, %v83
    %v85 = vrot.slane %v80, %v84
    %vm87 = vcmask 261120
    %v89 = vsel %vm87, %v75, 0
    %91 = vmatprep.subr.mxu0 0.0
    %92 = vmatpush1.msra.mxu0 0.0
    %93 = vmatprep.subr.mxu0 0.0
    %94 = vmatpush1.msra.mxu0 0.0
    %95 = vmatprep.subr.mxu0 0.0
    %96 = vmatpush1.msra.mxu0 0.0
    %97 = vmatprep.subr.mxu0 0.0
    %98 = vmatpush1.msra.mxu0 0.0
    %99 = vmatprep.subr.mxu0 0.0
    %100 = vmatpush1.msra.mxu0 0.0
    %101 = vmatprep.subr.mxu0 0.0
    %102 = vmatpush1.msra.mxu0 0.0
    %103 = vmatprep.subr.mxu0 0.0
    %104 = vmatpush1.msra.mxu0 0.0
    %105 = vmatprep.subr.mxu0 0.0
    %106 = vmatpush1.msra.mxu0 0.0
    %107 = vmatprep.subr.mxu0 0.0
    %108 = vmatpush1.msra.mxu0 0.0
    %109 = vmatprep.subr.mxu0 0.0
    %110 = vmatpush1.msra.mxu0 0.0
    %111 = vmatprep.subr.mxu0 0.0
    %112 = vmatpush1.msra.mxu0 0.0
    %113 = vmatprep.subr.mxu0 0.0
    %114 = vmatpush1.msra.mxu0 0.0
    %115 = vmatprep.subr.mxu0 0.0
    %116 = vmatpush1.msra.mxu0 %v79
    %117 = vmatprep.subr.mxu0 0.0
    %118 = vmatpush1.msra.mxu0 %v78
    %119 = vmatprep.subr.mxu0 0.0
    %120 = vmatpush1.msra.mxu0 %v77
    %121 = vmatprep.subr.mxu0 0.0
    %122 = vmatpush1.msra.mxu0 %v76
    %123 = vmatprep.subr.mxu0 0.0
    %124 = vmatpush2.msra.mxu0 0.0
    %125 = vmatprep.subr.mxu0 0.0
    %126 = vmatpush2.msra.mxu0 0.0
    %127 = vmatprep.subr.mxu0 0.0
    %128 = vmatpush2.msra.mxu0 0.0
    %129 = vmatprep.subr.mxu0 0.0
    %130 = vmatpush2.msra.mxu0 0.0
    %131 = vmatprep.subr.mxu0 0.0
    %132 = vmatpush2.msra.mxu0 0.0
    %133 = vmatprep.subr.mxu0 0.0
    %134 = vmatpush2.msra.mxu0 0.0
    %135 = vmatprep.subr.mxu0 0.0
    %136 = vmatpush2.msra.mxu0 0.0
    %137 = vmatprep.subr.mxu0 0.0
    %138 = vmatpush2.msra.mxu0 0.0
    %139 = vmatprep.subr.mxu0 0.0
    %140 = vmatpush2.msra.mxu0 0.0
    %141 = vmatprep.subr.mxu0 0.0
    %142 = vmatpush2.msra.mxu0 0.0
    %143 = vmatprep.subr.mxu0 0.0
    %144 = vmatpush2.msra.mxu0 0.0
    %145 = vmatprep.subr.mxu0 0.0
    %146 = vmatpush2.msra.mxu0 0.0
    %147 = vmatprep.subr.mxu0 0.0
    %148 = vmatpush2.msra.mxu0 0.0
    %149 = vmatprep.subr.mxu0 0.0
    %150 = vmatpush2.msra.mxu0 0.0
    %151 = vmatprep.subr.mxu0 0.0
    %152 = vmatpush2.msra.mxu0 0.0
    %153 = vmatprep.subr.mxu0 0.0
    %154 = vmatpush2.msra.mxu0 0.0
    %155 = vmatprep.mubr.f32.mxu0 0.0
    %156 = vmatmul.mubr.f32.gmra.mxu0 %v89
    %v157 = vpop.f32.mrf.mxu0
    %v158 = vadd.f32 %v85, %v157
    %v159 = vpop.f32.mrf.mxu0
    %160 = vdwg.mxu0
    %v161 = vld [vmem:[#allocation5] sm:$0xff]
    %v162 = vld [vmem:[#allocation8] sm:$0xff]
    %v163 = vld [vmem:[#allocation8 + $0x8] sm:$0xff]
    %v164 = vld [vmem:[#allocation8 + $0x10] sm:$0xff]
    %v165 = vld [vmem:[#allocation8 + $0x18] sm:$0xff]
    %v167 = vsel %vm87, %v161, 0
    %169 = vmatprep.subr.mxu0 0.0
    %170 = vmatpush1.msra.mxu0 0.0
    %171 = vmatprep.subr.mxu0 0.0
    %172 = vmatpush1.msra.mxu0 0.0
    %173 = vmatprep.subr.mxu0 0.0
    %174 = vmatpush1.msra.mxu0 0.0
    %175 = vmatprep.subr.mxu0 0.0
    %176 = vmatpush1.msra.mxu0 0.0
    %177 = vmatprep.subr.mxu0 0.0
    %178 = vmatpush1.msra.mxu0 0.0
    %179 = vmatprep.subr.mxu0 0.0
    %180 = vmatpush1.msra.mxu0 0.0
    %181 = vmatprep.subr.mxu0 0.0
    %182 = vmatpush1.msra.mxu0 0.0
    %183 = vmatprep.subr.mxu0 0.0
    %184 = vmatpush1.msra.mxu0 0.0
    %185 = vmatprep.subr.mxu0 0.0
    %186 = vmatpush1.msra.mxu0 0.0
    %187 = vmatprep.subr.mxu0 0.0
    %188 = vmatpush1.msra.mxu0 0.0
    %189 = vmatprep.subr.mxu0 0.0
    %190 = vmatpush1.msra.mxu0 0.0
    %191 = vmatprep.subr.mxu0 0.0
    %192 = vmatpush1.msra.mxu0 0.0
    %193 = vmatprep.subr.mxu0 0.0
    %194 = vmatpush1.msra.mxu0 %v165
    %195 = vmatprep.subr.mxu0 0.0
    %196 = vmatpush1.msra.mxu0 %v164
    %197 = vmatprep.subr.mxu0 0.0
    %198 = vmatpush1.msra.mxu0 %v163
    %199 = vmatprep.subr.mxu0 0.0
    %200 = vmatpush1.msra.mxu0 %v162
    %201 = vmatprep.subr.mxu0 0.0
    %202 = vmatpush2.msra.mxu0 0.0
    %203 = vmatprep.subr.mxu0 0.0
    %204 = vmatpush2.msra.mxu0 0.0
    %205 = vmatprep.subr.mxu0 0.0
    %206 = vmatpush2.msra.mxu0 0.0
    %207 = vmatprep.subr.mxu0 0.0
    %208 = vmatpush2.msra.mxu0 0.0
    %209 = vmatprep.subr.mxu0 0.0
    %210 = vmatpush2.msra.mxu0 0.0
    %211 = vmatprep.subr.mxu0 0.0
    %212 = vmatpush2.msra.mxu0 0.0
    %213 = vmatprep.subr.mxu0 0.0
    %214 = vmatpush2.msra.mxu0 0.0
    %215 = vmatprep.subr.mxu0 0.0
    %216 = vmatpush2.msra.mxu0 0.0
    %217 = vmatprep.subr.mxu0 0.0
    %218 = vmatpush2.msra.mxu0 0.0
    %219 = vmatprep.subr.mxu0 0.0
    %220 = vmatpush2.msra.mxu0 0.0
    %221 = vmatprep.subr.mxu0 0.0
    %222 = vmatpush2.msra.mxu0 0.0
    %223 = vmatprep.subr.mxu0 0.0
    %224 = vmatpush2.msra.mxu0 0.0
    %225 = vmatprep.subr.mxu0 0.0
    %226 = vmatpush2.msra.mxu0 0.0
    %227 = vmatprep.subr.mxu0 0.0
    %228 = vmatpush2.msra.mxu0 0.0
    %229 = vmatprep.subr.mxu0 0.0
    %230 = vmatpush2.msra.mxu0 0.0
    %231 = vmatprep.subr.mxu0 0.0
    %232 = vmatpush2.msra.mxu0 0.0
    %233 = vmatprep.mubr.f32.mxu0 0.0
    %234 = vmatmul.mubr.f32.gmra.mxu0 %v167
    %v235 = vpop.f32.mrf.mxu0
    %v236 = vadd.f32 0.0, %v235
    %v237 = vpop.f32.mrf.mxu0
    %238 = vdwg.mxu0
    %vm239 = vcmp.eq.f32.partialorder %v236, 0.0
    %v240 = vmax.f32 %v236, 1e-16
    %v241 = vrsqrt.pop %v240
    %v242 = vmul.f32 %v240, %v241
    %v243 = vmul.f32 %v158, %v241
    %v244 = vmul.f32 %v243, 0.70710677
    %v245 = verf.f32.pop %v244
    %v246 = vadd.f32 %v245, 1.0
    %v247 = vmul.f32 %v246, 0.5
    %v248 = vmul.f32 %v243, %v243
    %v249 = vmul.f32 %v248, -0.5
    %v250 = vmul.f32 %v249, 1.442695
    %v251 = vpow.pop %v250
    %v252 = vmul.f32 %v251, 0.3989423
    %v253 = vmul.f32 %v158, %v158
    %v254 = vmul.f32 %v158, %v247
    %v255 = vmul.f32 %v242, %v252
    %v256 = vadd.f32 %v254, %v255
    %v257 = vadd.f32 %v240, %v253
    %v258 = vmul.f32 %v257, %v247
    %v259 = vmul.f32 %v158, %v242
    %v260 = vmul.f32 %v259, %v252
    %v261 = vadd.f32 %v258, %v260
    %v262 = vmul.f32 %v256, %v256
    %v263 = vsub.f32 %v261, %v262
    %v264 = vmax.f32 %v158, 0.0
    %v265 = vsel %vm239, %v264, %v256
    %v266 = vmax.f32 %v263, 1e-16
    %v267 = vsel %vm239, 0.0, %v266
    %268 = vst [vmem:[#allocation10] sm:$0xff] %v265
    %269 = vst [vmem:[#allocation11] sm:$0xff] %v267
    // Predicated region
    $region38: #{tpu_custom_call.1} parent=1 // pred_check
      _
    $region39: #{tpu_custom_call.1} parent=1 // pred_check_branch
      %271 = sbr.rel (0) target = $region41
    $region40: #{tpu_custom_call.1} parent=1 // pred_region
      %s273 = ssub.s32 128, 128
      %274 = vsyncadd [#allocation4], %s273
      %s276 = sshll.u32 [#allocation10], 4
      %s277 = int_to_ptr.vmem [resolvable:$true] %s276
      %279 = dma.vmem_to_hbm [thread:$0]  %s277, 128, %s5, [#allocation4]
    $region41: #{tpu_custom_call.1} parent=1 // pred_fallthru
      _
    // Predicated region
    $region42: #{tpu_custom_call.1} parent=1 // pred_check
      _
    $region43: #{tpu_custom_call.1} parent=1 // pred_check_branch
      %281 = sbr.rel (0) target = $region45
    $region44: #{tpu_custom_call.1} parent=1 // pred_region
      %s283 = ssub.s32 128, 128
      %284 = vsyncadd [#allocation12], %s283
      %s286 = sshll.u32 [#allocation11], 4
      %s287 = int_to_ptr.vmem [resolvable:$true] %s286
      %289 = dma.vmem_to_hbm [thread:$0]  %s287, 128, %s6, [#allocation12]
    $region45: #{tpu_custom_call.1} parent=1 // pred_fallthru
      _
    // Predicated region
    $region46: #{tpu_custom_call.1} parent=1 // pred_check
      _
    $region47: #{tpu_custom_call.1} parent=1 // pred_check_branch
      %291 = sbr.rel (0) target = $region49
    $region48: #{tpu_custom_call.1} parent=1 // pred_region
      %292 = dma.done [#allocation4], 128
    $region49: #{tpu_custom_call.1} parent=1 // pred_fallthru
      _
    // Predicated region
    $region50: #{tpu_custom_call.1} parent=1 // pred_check
      _
    $region51: #{tpu_custom_call.1} parent=1 // pred_check_branch
      %294 = sbr.rel (0) target = $region53
    $region52: #{tpu_custom_call.1} parent=1 // pred_region
      %295 = dma.done [#allocation12], 128
    $region53: #{tpu_custom_call.1} parent=1 // pred_fallthru
      _
    %296 = vsyncpa [#allocation3], 1
    %297 = vsyncpa [#allocation6], 1
    %298 = vsyncpa [#allocation9], 1
    %299 = vsyncpa [#allocation4], 1
    %300 = vsyncpa [#allocation12], 1

// kernel: tpu_custom_call.1
$region0: #{tpu_custom_call.1}
  #allocation0 [shape = 'u32[]', space=smem, size = 0x4, offset = 0x4, fixed_abs, tag = 'smem constant byte address 0x4 - core index']
  #allocation1 [shape = 'u32[144,128]{1,0:T(1,128)}', space=vmem, size = 0x12000, scoped, tag = 'internal scratch']
  %s0 = inlined_call_operand.hbm [shape: f32[8,32], index: 0, kind: input, shape index: {}]
  %s1 = inlined_call_operand.hbm [shape: f32[8,32], index: 1, kind: input, shape index: {}]
  %s2 = inlined_call_operand.hbm [shape: f32[32,128], index: 2, kind: input, shape index: {}]
  %s3 = inlined_call_operand.hbm [shape: f32[32,128], index: 3, kind: input, shape index: {}]
  %s4 = inlined_call_operand.vmem [shape: f32[1,128], index: 4, kind: input, shape index: {}]
  %s5 = inlined_call_operand.hbm [shape: f32[8,128], index: 5, kind: output, shape index: {0}]
  %s6 = inlined_call_operand.hbm [shape: f32[8,128], index: 6, kind: output, shape index: {1}]
  %7 = xla_tuple %s5, %s6
  %s8 = sld [smem:[#allocation0]]
  $region54: #{tpu_custom_call.1} parent=0
    _
  %s10 = ssub.s32 1, %s8
  %s11 = scalar_select 0, %s10, %s8
  $region1: #{tpu_custom_call.1} parent=0
    #allocation2 [shape = 'u8[4096]{0}', space=vmem, size = 0x1000, scoped, tag = 'input window, operand 0, single buffered']
    #allocation3 [shape = 's32[1]{0}', space=sflag, size = 0x4, scoped, tag = 'scoped memory for tpu_custom_call.1']
    #allocation4 [shape = 's32[1]{0}', space=sflag, size = 0x4, scoped, tag = 'scoped memory for tpu_custom_call.1']
    #allocation5 [shape = 'u8[4096]{0}', space=vmem, size = 0x1000, scoped, tag = 'input window, operand 1, single buffered']
    #allocation6 [shape = 's32[1]{0}', space=sflag, size = 0x4, scoped, tag = 'scoped memory for tpu_custom_call.1']
    #allocation7 [shape = 'u8[16384]{0}', space=vmem, size = 0x4000, scoped, tag = 'input window, operand 2, single buffered']
    #allocation8 [shape = 'u8[16384]{0}', space=vmem, size = 0x4000, scoped, tag = 'input window, operand 3, single buffered']
    #allocation9 [shape = 's32[1]{0}', space=sflag, size = 0x4, scoped, tag = 'scoped memory for tpu_custom_call.1']
    #allocation10 [shape = 'u8[4096]{0}', space=vmem, size = 0x1000, scoped, tag = 'output window, operand 0, single buffered']
    #allocation11 [shape = 'u8[4096]{0}', space=vmem, size = 0x1000, scoped, tag = 'output window, operand 1, single buffered']
    #allocation12 [shape = 's32[1]{0}', space=sflag, size = 0x4, scoped, tag = 'scoped memory for tpu_custom_call.1']
    %12 = vsyncpa [#allocation3], 0
    %13 = vsyncpa [#allocation6], 0
    %14 = vsyncpa [#allocation9], 0
    %15 = vsyncpa [#allocation4], 0
    %16 = vsyncpa [#allocation12], 0
    // Predicated region
    $region2: #{tpu_custom_call.1} parent=1 // pred_check
      _
    $region3: #{tpu_custom_call.1} parent=1 // pred_check_branch
      %18 = sbr.rel (0) target = $region5
    $region4: #{tpu_custom_call.1} parent=1 // pred_region
      %s20 = ssub.s32 128, 128
      %21 = vsyncadd [#allocation3], %s20
      %s23 = sshll.u32 [#allocation2], 4
      %s24 = int_to_ptr.vmem [resolvable:$true] %s23
      %26 = dma.hbm_to_vmem [thread:$0]  %s0, 128, %s24, [#allocation3]
    $region5: #{tpu_custom_call.1} parent=1 // pred_fallthru
      _
    // Predicated region
    $region6: #{tpu_custom_call.1} parent=1 // pred_check
      _
    $region7: #{tpu_custom_call.1} parent=1 // pred_check_branch
      %28 = sbr.rel (0) target = $region9
    $region8: #{tpu_custom_call.1} parent=1 // pred_region
      %s30 = ssub.s32 128, 128
      %31 = vsyncadd [#allocation6], %s30
      %s33 = sshll.u32 [#allocation5], 4
      %s34 = int_to_ptr.vmem [resolvable:$true] %s33
      %36 = dma.hbm_to_vmem [thread:$0]  %s1, 128, %s34, [#allocation6]
    $region9: #{tpu_custom_call.1} parent=1 // pred_fallthru
      _
    // Predicated region
    $region10: #{tpu_custom_call.1} parent=1 // pred_check
      _
    $region11: #{tpu_custom_call.1} parent=1 // pred_check_branch
      %38 = sbr.rel (0) target = $region13
    $region12: #{tpu_custom_call.1} parent=1 // pred_region
      %s40 = ssub.s32 512, 512
      %41 = vsyncadd [#allocation6], %s40
      %s42 = sshll.u32 [#allocation7], 4
      %s43 = int_to_ptr.vmem [resolvable:$true] %s42
      %48 = dma.hbm_to_vmem [thread:$0]  %s2, 512, %s43, [#allocation6], 128, 128, 8
    $region13: #{tpu_custom_call.1} parent=1 // pred_fallthru
      _
    // Predicated region
    $region14: #{tpu_custom_call.1} parent=1 // pred_check
      _
    $region15: #{tpu_custom_call.1} parent=1 // pred_check_branch
      %50 = sbr.rel (0) target = $region17
    $region16: #{tpu_custom_call.1} parent=1 // pred_region
      %s52 = ssub.s32 512, 512
      %53 = vsyncadd [#allocation9], %s52
      %s54 = sshll.u32 [#allocation8], 4
      %s55 = int_to_ptr.vmem [resolvable:$true] %s54
      %60 = dma.hbm_to_vmem [thread:$0]  %s3, 512, %s55, [#allocation9], 128, 128, 8
    $region17: #{tpu_custom_call.1} parent=1 // pred_fallthru
      _
    // Predicated region
    $region18: #{tpu_custom_call.1} parent=1 // pred_check
      _
    $region19: #{tpu_custom_call.1} parent=1 // pred_check_branch
      %62 = sbr.rel (0) target = $region21
    $region20: #{tpu_custom_call.1} parent=1 // pred_region
      _
    $region21: #{tpu_custom_call.1} parent=1 // pred_fallthru
      _
    // Predicated region
    $region22: #{tpu_custom_call.1} parent=1 // pred_check
      _
    $region23: #{tpu_custom_call.1} parent=1 // pred_check_branch
      %64 = sbr.rel (0) target = $region25
    $region24: #{tpu_custom_call.1} parent=1 // pred_region
      %65 = dma.done [#allocation3], 128
    $region25: #{tpu_custom_call.1} parent=1 // pred_fallthru
      _
    // Predicated region
    $region26: #{tpu_custom_call.1} parent=1 // pred_check
      _
    $region27: #{tpu_custom_call.1} parent=1 // pred_check_branch
      %67 = sbr.rel (0) target = $region29
    $region28: #{tpu_custom_call.1} parent=1 // pred_region
      %68 = dma.done [#allocation6], 128
    $region29: #{tpu_custom_call.1} parent=1 // pred_fallthru
      _
    // Predicated region
    $region30: #{tpu_custom_call.1} parent=1 // pred_check
      _
    $region31: #{tpu_custom_call.1} parent=1 // pred_check_branch
      %70 = sbr.rel (0) target = $region33
    $region32: #{tpu_custom_call.1} parent=1 // pred_region
      %71 = dma.done [#allocation6], 512
    $region33: #{tpu_custom_call.1} parent=1 // pred_fallthru
      _
    // Predicated region
    $region34: #{tpu_custom_call.1} parent=1 // pred_check
      _
    $region35: #{tpu_custom_call.1} parent=1 // pred_check_branch
      %73 = sbr.rel (0) target = $region37
    $region36: #{tpu_custom_call.1} parent=1 // pred_region
      %74 = dma.done [#allocation9], 512
    $region37: #{tpu_custom_call.1} parent=1 // pred_fallthru
      _
    %v75 = vld [vmem:[#allocation2] sm:$0xff]
    %v76 = vld [vmem:[#allocation7] sm:$0xff]
    %v77 = vld [vmem:[#allocation7 + $0x8] sm:$0xff]
    %v78 = vld [vmem:[#allocation7 + $0x10] sm:$0xff]
    %v79 = vld [vmem:[#allocation7 + $0x18] sm:$0xff]
    %v80 = vld [vmem:[%s4] sm:$0x1]
    %v82 = vlaneseq
    %v83 = vshrl.u32 %v82, 7
    %v84 = vsub.s32 0, %v83
    %v85 = vrot.slane %v80, %v84
    %vm87 = vcmask 261120
    %v89 = vsel %vm87, %v75, 0
    %91 = vmatprep.subr.mxu0 0.0
    %92 = vmatpush1.msra.mxu0 0.0
    %93 = vmatprep.subr.mxu0 0.0
    %94 = vmatpush1.msra.mxu0 0.0
    %95 = vmatprep.subr.mxu0 0.0
    %96 = vmatpush1.msra.mxu0 0.0
    %97 = vmatprep.subr.mxu0 0.0
    %98 = vmatpush1.msra.mxu0 0.0
    %99 = vmatprep.subr.mxu0 0.0
    %100 = vmatpush1.msra.mxu0 0.0
    %101 = vmatprep.subr.mxu0 0.0
    %102 = vmatpush1.msra.mxu0 0.0
    %103 = vmatprep.subr.mxu0 0.0
    %104 = vmatpush1.msra.mxu0 0.0
    %105 = vmatprep.subr.mxu0 0.0
    %106 = vmatpush1.msra.mxu0 0.0
    %107 = vmatprep.subr.mxu0 0.0
    %108 = vmatpush1.msra.mxu0 0.0
    %109 = vmatprep.subr.mxu0 0.0
    %110 = vmatpush1.msra.mxu0 0.0
    %111 = vmatprep.subr.mxu0 0.0
    %112 = vmatpush1.msra.mxu0 0.0
    %113 = vmatprep.subr.mxu0 0.0
    %114 = vmatpush1.msra.mxu0 0.0
    %115 = vmatprep.subr.mxu0 0.0
    %116 = vmatpush1.msra.mxu0 %v79
    %117 = vmatprep.subr.mxu0 0.0
    %118 = vmatpush1.msra.mxu0 %v78
    %119 = vmatprep.subr.mxu0 0.0
    %120 = vmatpush1.msra.mxu0 %v77
    %121 = vmatprep.subr.mxu0 0.0
    %122 = vmatpush1.msra.mxu0 %v76
    %123 = vmatprep.subr.mxu0 0.0
    %124 = vmatpush2.msra.mxu0 0.0
    %125 = vmatprep.subr.mxu0 0.0
    %126 = vmatpush2.msra.mxu0 0.0
    %127 = vmatprep.subr.mxu0 0.0
    %128 = vmatpush2.msra.mxu0 0.0
    %129 = vmatprep.subr.mxu0 0.0
    %130 = vmatpush2.msra.mxu0 0.0
    %131 = vmatprep.subr.mxu0 0.0
    %132 = vmatpush2.msra.mxu0 0.0
    %133 = vmatprep.subr.mxu0 0.0
    %134 = vmatpush2.msra.mxu0 0.0
    %135 = vmatprep.subr.mxu0 0.0
    %136 = vmatpush2.msra.mxu0 0.0
    %137 = vmatprep.subr.mxu0 0.0
    %138 = vmatpush2.msra.mxu0 0.0
    %139 = vmatprep.subr.mxu0 0.0
    %140 = vmatpush2.msra.mxu0 0.0
    %141 = vmatprep.subr.mxu0 0.0
    %142 = vmatpush2.msra.mxu0 0.0
    %143 = vmatprep.subr.mxu0 0.0
    %144 = vmatpush2.msra.mxu0 0.0
    %145 = vmatprep.subr.mxu0 0.0
    %146 = vmatpush2.msra.mxu0 0.0
    %147 = vmatprep.subr.mxu0 0.0
    %148 = vmatpush2.msra.mxu0 0.0
    %149 = vmatprep.subr.mxu0 0.0
    %150 = vmatpush2.msra.mxu0 0.0
    %151 = vmatprep.subr.mxu0 0.0
    %152 = vmatpush2.msra.mxu0 0.0
    %153 = vmatprep.subr.mxu0 0.0
    %154 = vmatpush2.msra.mxu0 0.0
    %155 = vmatprep.mubr.f32.mxu0 0.0
    %156 = vmatmul.mubr.f32.gmra.mxu0 %v89
    %v157 = vpop.f32.mrf.mxu0
    %v158 = vadd.f32 %v85, %v157
    %v159 = vpop.f32.mrf.mxu0
    %160 = vdwg.mxu0
    %v161 = vld [vmem:[#allocation5] sm:$0xff]
    %v162 = vld [vmem:[#allocation8] sm:$0xff]
    %v163 = vld [vmem:[#allocation8 + $0x8] sm:$0xff]
    %v164 = vld [vmem:[#allocation8 + $0x10] sm:$0xff]
    %v165 = vld [vmem:[#allocation8 + $0x18] sm:$0xff]
    %v167 = vsel %vm87, %v161, 0
    %169 = vmatprep.subr.mxu0 0.0
    %170 = vmatpush1.msra.mxu0 0.0
    %171 = vmatprep.subr.mxu0 0.0
    %172 = vmatpush1.msra.mxu0 0.0
    %173 = vmatprep.subr.mxu0 0.0
    %174 = vmatpush1.msra.mxu0 0.0
    %175 = vmatprep.subr.mxu0 0.0
    %176 = vmatpush1.msra.mxu0 0.0
    %177 = vmatprep.subr.mxu0 0.0
    %178 = vmatpush1.msra.mxu0 0.0
    %179 = vmatprep.subr.mxu0 0.0
    %180 = vmatpush1.msra.mxu0 0.0
    %181 = vmatprep.subr.mxu0 0.0
    %182 = vmatpush1.msra.mxu0 0.0
    %183 = vmatprep.subr.mxu0 0.0
    %184 = vmatpush1.msra.mxu0 0.0
    %185 = vmatprep.subr.mxu0 0.0
    %186 = vmatpush1.msra.mxu0 0.0
    %187 = vmatprep.subr.mxu0 0.0
    %188 = vmatpush1.msra.mxu0 0.0
    %189 = vmatprep.subr.mxu0 0.0
    %190 = vmatpush1.msra.mxu0 0.0
    %191 = vmatprep.subr.mxu0 0.0
    %192 = vmatpush1.msra.mxu0 0.0
    %193 = vmatprep.subr.mxu0 0.0
    %194 = vmatpush1.msra.mxu0 %v165
    %195 = vmatprep.subr.mxu0 0.0
    %196 = vmatpush1.msra.mxu0 %v164
    %197 = vmatprep.subr.mxu0 0.0
    %198 = vmatpush1.msra.mxu0 %v163
    %199 = vmatprep.subr.mxu0 0.0
    %200 = vmatpush1.msra.mxu0 %v162
    %201 = vmatprep.subr.mxu0 0.0
    %202 = vmatpush2.msra.mxu0 0.0
    %203 = vmatprep.subr.mxu0 0.0
    %204 = vmatpush2.msra.mxu0 0.0
    %205 = vmatprep.subr.mxu0 0.0
    %206 = vmatpush2.msra.mxu0 0.0
    %207 = vmatprep.subr.mxu0 0.0
    %208 = vmatpush2.msra.mxu0 0.0
    %209 = vmatprep.subr.mxu0 0.0
    %210 = vmatpush2.msra.mxu0 0.0
    %211 = vmatprep.subr.mxu0 0.0
    %212 = vmatpush2.msra.mxu0 0.0
    %213 = vmatprep.subr.mxu0 0.0
    %214 = vmatpush2.msra.mxu0 0.0
    %215 = vmatprep.subr.mxu0 0.0
    %216 = vmatpush2.msra.mxu0 0.0
    %217 = vmatprep.subr.mxu0 0.0
    %218 = vmatpush2.msra.mxu0 0.0
    %219 = vmatprep.subr.mxu0 0.0
    %220 = vmatpush2.msra.mxu0 0.0
    %221 = vmatprep.subr.mxu0 0.0
    %222 = vmatpush2.msra.mxu0 0.0
    %223 = vmatprep.subr.mxu0 0.0
    %224 = vmatpush2.msra.mxu0 0.0
    %225 = vmatprep.subr.mxu0 0.0
    %226 = vmatpush2.msra.mxu0 0.0
    %227 = vmatprep.subr.mxu0 0.0
    %228 = vmatpush2.msra.mxu0 0.0
    %229 = vmatprep.subr.mxu0 0.0
    %230 = vmatpush2.msra.mxu0 0.0
    %231 = vmatprep.subr.mxu0 0.0
    %232 = vmatpush2.msra.mxu0 0.0
    %233 = vmatprep.mubr.f32.mxu0 0.0
    %234 = vmatmul.mubr.f32.gmra.mxu0 %v167
    %v235 = vpop.f32.mrf.mxu0
    %v236 = vadd.f32 0.0, %v235
    %v237 = vpop.f32.mrf.mxu0
    %238 = vdwg.mxu0
    %vm239 = vcmp.eq.f32.partialorder %v236, 0.0
    %v240 = vmax.f32 %v236, 1e-16
    %v241 = vrsqrt.pop %v240
    %v242 = vmul.f32 %v240, %v241
    %v243 = vmul.f32 %v158, %v241
    %v244 = vmul.f32 %v243, 0.70710677
    %v245 = verf.f32.pop %v244
    %v246 = vadd.f32 %v245, 1.0
    %v247 = vmul.f32 %v246, 0.5
    %v248 = vmul.f32 %v243, %v243
    %v249 = vmul.f32 %v248, -0.5
    %v250 = vmul.f32 %v249, 1.442695
    %v251 = vpow.pop %v250
    %v252 = vmul.f32 %v251, 0.3989423
    %v253 = vmul.f32 %v158, %v158
    %v254 = vmul.f32 %v158, %v247
    %v255 = vmul.f32 %v242, %v252
    %v256 = vadd.f32 %v254, %v255
    %v257 = vadd.f32 %v240, %v253
    %v258 = vmul.f32 %v257, %v247
    %v259 = vmul.f32 %v158, %v242
    %v260 = vmul.f32 %v259, %v252
    %v261 = vadd.f32 %v258, %v260
    %v262 = vmul.f32 %v256, %v256
    %v263 = vsub.f32 %v261, %v262
    %v264 = vmax.f32 %v158, 0.0
    %v265 = vsel %vm239, %v264, %v256
    %v266 = vmax.f32 %v263, 1e-16
    %v267 = vsel %vm239, 0.0, %v266
    %268 = vst [vmem:[#allocation10] sm:$0xff] %v265
    %269 = vst [vmem:[#allocation11] sm:$0xff] %v267
    // Predicated region
    $region38: #{tpu_custom_call.1} parent=1 // pred_check
      _
    $region39: #{tpu_custom_call.1} parent=1 // pred_check_branch
      %271 = sbr.rel (0) target = $region41
    $region40: #{tpu_custom_call.1} parent=1 // pred_region
      %s273 = ssub.s32 128, 128
      %274 = vsyncadd [#allocation4], %s273
      %s276 = sshll.u32 [#allocation10], 4
      %s277 = int_to_ptr.vmem [resolvable:$true] %s276
      %279 = dma.vmem_to_hbm [thread:$0]  %s277, 128, %s5, [#allocation4]
    $region41: #{tpu_custom_call.1} parent=1 // pred_fallthru
      _
    // Predicated region
    $region42: #{tpu_custom_call.1} parent=1 // pred_check
      _
    $region43: #{tpu_custom_call.1} parent=1 // pred_check_branch
      %281 = sbr.rel (0) target = $region45
    $region44: #{tpu_custom_call.1} parent=1 // pred_region
      %s283 = ssub.s32 128, 128
      %284 = vsyncadd [#allocation12], %s283
      %s286 = sshll.u32 [#allocation11], 4
      %s287 = int_to_ptr.vmem [resolvable:$true] %s286
      %289 = dma.vmem_to_hbm [thread:$0]  %s287, 128, %s6, [#allocation12]
    $region45: #{tpu_custom_call.1} parent=1 // pred_fallthru
      _
    // Predicated region
    $region46: #{tpu_custom_call.1} parent=1 // pred_check
      _
    $region47: #{tpu_custom_call.1} parent=1 // pred_check_branch
      %291 = sbr.rel (0) target = $region49
    $region48: #{tpu_custom_call.1} parent=1 // pred_region
      %292 = dma.done [#allocation4], 128
    $region49: #{tpu_custom_call.1} parent=1 // pred_fallthru
      _
    // Predicated region
    $region50: #{tpu_custom_call.1} parent=1 // pred_check
      _
    $region51: #{tpu_custom_call.1} parent=1 // pred_check_branch
      %294 = sbr.rel (0) target = $region53
    $region52: #{tpu_custom_call.1} parent=1 // pred_region
      %295 = dma.done [#allocation12], 128
    $region53: #{tpu_custom_call.1} parent=1 // pred_fallthru
      _
    %296 = vsyncpa [#allocation3], 1
    %297 = vsyncpa [#allocation6], 1
    %298 = vsyncpa [#allocation9], 1
    %299 = vsyncpa [#allocation4], 1
    %300 = vsyncpa [#allocation12], 1

</llo_original>
